<compile_context>
chip_gen: v5e
topology: v5e:2x2
jax: 0.10.0
libtpu: 0.0.40
codegen_flags: <defaults>
</compile_context>

<pallas_src>
import jax
import jax.numpy as jnp
from jax.experimental import pallas as pl
from jax.experimental.pallas import tpu as pltpu


_LANE = 128                       # pad class dim to a multiple of the lane width
_ROW_PACK = 16                    # row multiple (covers bf16 packing; f32 needs 8)
_VMEM_BUDGET = 16 * 1024 * 1024   # buffer budget, conservative for v7x (64 MiB VMEM)
_MAX_ROW_TILE = 2048              # keep the grid long enough to pipeline / use 2 TCs


def _round_up(x, m):
    return (x + m - 1) // m * m


def _log_softmax_kernel(x_ref, o_ref):
    """Row-wise numerically-stable log-softmax on a (row_tile, C_pad) block."""
    x = x_ref[...].astype(jnp.float32)
    m = jnp.max(x, axis=-1, keepdims=True)
    shifted = x - m
    denom = jnp.sum(jnp.exp(shifted), axis=-1, keepdims=True)
    o_ref[...] = (shifted - jnp.log(denom)).astype(o_ref.dtype)


def _pick_row_tile(n_rows, c_pad, dtype):
    """Largest row tile (multiple of 16) whose double-buffered in+out footprint
    (2 input bufs + 2 output bufs) fits the VMEM budget, capped so large inputs
    still produce a multi-step grid."""
    itemsize = jnp.dtype(dtype).itemsize
    t = _VMEM_BUDGET // (4 * c_pad * itemsize)
    t = max(_ROW_PACK, (t // _ROW_PACK) * _ROW_PACK)
    t = min(t, _MAX_ROW_TILE)
    t = min(t, _round_up(n_rows, _ROW_PACK))   # don't exceed actual work
    return int(t)


def _log_softmax_padded(x_pad, row_tile):
    """x_pad: (N_pad, C_pad) with N_pad % row_tile == 0, C_pad % 128 == 0."""
    n_pad, c_pad = x_pad.shape
    grid = (n_pad // row_tile,)
    return pl.pallas_call(
        _log_softmax_kernel,
        out_shape=jax.ShapeDtypeStruct((n_pad, c_pad), x_pad.dtype),
        grid_spec=pltpu.PrefetchScalarGridSpec(
            num_scalar_prefetch=0,
            grid=grid,
            in_specs=[pl.BlockSpec((row_tile, c_pad), lambda i: (i, 0))],
            out_specs=pl.BlockSpec((row_tile, c_pad), lambda i: (i, 0)),
        ),
        compiler_params=pltpu.CompilerParams(
            dimension_semantics=("parallel",),
            vmem_limit_bytes=64 * 1024 * 1024,
        ),
    )(x_pad)


def multi_label_classification_scores(logits_list):
    """Forward pass of MultiLabelClassificationScores.

    logits_list: list of arrays, each (..., C_i).
    Returns a list of (prod(leading dims), C_i) arrays of per-class log-prob
    scores — the numeric content of the List[List[Dict[str, float]]] output.
    """
    if not logits_list:
        return []

    # logit.view(-1, logit.size(-1)) for every head
    flats = [l.reshape(-1, l.shape[-1]) for l in logits_list]
    dtype = flats[0].dtype

    # Common lane-dense class width (multiple of 128) across all heads.
    c_pad = max(_round_up(f.shape[-1], _LANE) for f in flats)

    # Pad each head's class dim with -inf (doesn't change max / sum-exp for
    # real classes), then stack all heads row-wise => one fused kernel call.
    padded = []
    row_counts = []
    class_counts = []
    for f in flats:
        n, c = f.shape
        row_counts.append(n)
        class_counts.append(c)
        padded.append(jnp.pad(f, ((0, 0), (0, c_pad - c)),
                              constant_values=-jnp.inf))
    stacked = jnp.concatenate(padded, axis=0) if len(padded) > 1 else padded[0]
    n_total = stacked.shape[0]

    row_tile = _pick_row_tile(n_total, c_pad, dtype)
    n_pad = _round_up(n_total, row_tile)
    if n_pad != n_total:
        # Row filler must be finite so padded rows don't generate NaNs
        # (their outputs are discarded below).
        filler = jnp.zeros((n_pad - n_total, c_pad), dtype=dtype)
        stacked = jnp.concatenate([stacked, filler], axis=0)

    out = _log_softmax_padded(stacked, row_tile)

    # Split back into per-head results and drop class/row padding.
    results = []
    offset = 0
    for n, c in zip(row_counts, class_counts):
        results.append(out[offset:offset + n, :c])
        offset += n
    return results
    # TODO(synk): packaging scores into per-example {label_name: float} dicts
    # is host-side Python and not expressible in a TPU kernel.


if __name__ == "__main__":
    key = jax.random.PRNGKey(0)
    batch, seq = 2, 8                 # 16 flattened rows per head, 48 total
    class_sizes = (4, 6, 8)           # three label vocabularies

    keys = jax.random.split(key, len(class_sizes))
    logits_list = [
        jax.random.normal(k, (batch, seq, c), dtype=jnp.float32)
        for k, c in zip(keys, class_sizes)
    ]

    outs = multi_label_classification_scores(logits_list)
    outs = [jax.block_until_ready(o) for o in outs]

    # correctness check vs plain JAX
    for logit, out in zip(logits_list, outs):
        ref = jax.nn.log_softmax(logit.reshape(-1, logit.shape[-1]), axis=-1)
        assert out.shape == ref.shape, (out.shape, ref.shape)
        assert jnp.allclose(out, ref, atol=1e-5), "mismatch vs reference"

    print("KERNEL_OK")
</pallas_src>

<mosaic_0001>
module attributes {stable_mosaic.version = 11 : i64} {
  func.func @_log_softmax_kernel(%arg0: i32, %arg1: memref<48x128xf32, #tpu.memory_space<vmem>>, %arg2: memref<48x128xf32, #tpu.memory_space<vmem>>) attributes {dimension_semantics = [#tpu.dimension_semantics<parallel>], iteration_bounds = array<i64: 1>, scalar_prefetch = 0 : i64, scratch_operands = 0 : i64, tpu.core_type = #tpu.core_type<tc>, window_params = [{transform_indices = @transform_0, window_bounds = array<i64: 48, 128>}, {transform_indices = @transform_1, window_bounds = array<i64: 48, 128>}]} {
    %c0 = arith.constant 0 : index
    %c0_0 = arith.constant 0 : index
    %0 = vector.load %arg1[%c0, %c0_0] : memref<48x128xf32, #tpu.memory_space<vmem>>, vector<48x128xf32>
    %cst = arith.constant dense<0xFF800000> : vector<48xf32>
    %1 = vector.multi_reduction <maximumf>, %0, %cst [1] : vector<48x128xf32> to vector<48xf32>
    %2 = vector.shape_cast %1 : vector<48xf32> to vector<48x1xf32>
    %3 = vector.broadcast %2 : vector<48x1xf32> to vector<48x128xf32>
    %4 = arith.subf %0, %3 : vector<48x128xf32>
    %5 = math.exp %4 : vector<48x128xf32>
    %cst_1 = arith.constant dense<0.000000e+00> : vector<48xf32>
    %6 = vector.multi_reduction <add>, %5, %cst_1 [1] : vector<48x128xf32> to vector<48xf32>
    %7 = vector.shape_cast %6 : vector<48xf32> to vector<48x1xf32>
    %8 = math.log %7 : vector<48x1xf32>
    %9 = vector.broadcast %8 : vector<48x1xf32> to vector<48x128xf32>
    %10 = arith.subf %4, %9 : vector<48x128xf32>
    %c0_2 = arith.constant 0 : index
    %c0_3 = arith.constant 0 : index
    %11 = vector.load %arg2[%c0_2, %c0_3] : memref<48x128xf32, #tpu.memory_space<vmem>>, vector<48x128xf32>
    tpu.vector_store %arg2[%c0_2, %c0_3], %10 {strides = array<i32>} : memref<48x128xf32, #tpu.memory_space<vmem>>, vector<48x128xf32>,
    return
  }
  func.func @transform_0(%arg0: i32) -> (i32, i32) {
    %c0_i32 = arith.constant 0 : i32
    %c0_i32_0 = arith.constant 0 : i32
    return %arg0, %c0_i32 : i32, i32
  }
  func.func @transform_1(%arg0: i32) -> (i32, i32) {
    %c0_i32 = arith.constant 0 : i32
    %c0_i32_0 = arith.constant 0 : i32
    return %arg0, %c0_i32 : i32, i32
  }
}

</mosaic_0001>

<llo_original>
// kernel: tpu_custom_call.1
$region0: #{tpu_custom_call.1}
  #allocation0 [shape = 'u32[]', space=smem, size = 0x4, offset = 0x4, fixed_abs, tag = 'smem constant byte address 0x4 - core index']
  #allocation1 [shape = 'u32[72,128]{1,0:T(1,128)}', space=vmem, size = 0x9000, scoped, tag = 'internal scratch']
  %s0 = inlined_call_operand.hbm [shape: f32[48,128], index: 0, kind: input, shape index: {}]
  %s1 = inlined_call_operand.hbm [shape: f32[48,128], index: 1, kind: output, shape index: {}]
  %s2 = sld [smem:[#allocation0]]
  $region18: #{tpu_custom_call.1} parent=0
    _
  %s4 = ssub.s32 1, %s2
  %s5 = scalar_select 0, %s4, %s2
  $region1: #{tpu_custom_call.1} parent=0
    #allocation2 [shape = 'u8[24576]{0}', space=vmem, size = 0x6000, scoped, tag = 'input window, operand 0, single buffered']
    #allocation3 [shape = 's32[1]{0}', space=sflag, size = 0x4, scoped, tag = 'scoped memory for tpu_custom_call.1']
    #allocation4 [shape = 's32[1]{0}', space=sflag, size = 0x4, scoped, tag = 'scoped memory for tpu_custom_call.1']
    #allocation5 [shape = 'u8[24576]{0}', space=vmem, size = 0x6000, scoped, tag = 'output window, operand 0, single buffered']
    %6 = vsyncpa [#allocation3], 0
    %7 = vsyncpa [#allocation4], 0
    // Predicated region
    $region2: #{tpu_custom_call.1} parent=1 // pred_check
      _
    $region3: #{tpu_custom_call.1} parent=1 // pred_check_branch
      %9 = sbr.rel (0) target = $region5
    $region4: #{tpu_custom_call.1} parent=1 // pred_region
      %11 = vsyncadd [#allocation3], 0
      %s12 = sshll.u32 %s0, 4
      %s13 = int_to_ptr.hbm [resolvable:$true] %s12
      %s14 = sshll.u32 [#allocation2], 4
      %s15 = int_to_ptr.vmem [resolvable:$true] %s14
      %20 = dma.hbm_to_vmem [thread:$0]  %s13, 768, %s15, [#allocation3], 128, 128, 8
    $region5: #{tpu_custom_call.1} parent=1 // pred_fallthru
      _
    // Predicated region
    $region6: #{tpu_custom_call.1} parent=1 // pred_check
      _
    $region7: #{tpu_custom_call.1} parent=1 // pred_check_branch
      %22 = sbr.rel (0) target = $region9
    $region8: #{tpu_custom_call.1} parent=1 // pred_region
      %24 = dma.done [#allocation3], 768
    $region9: #{tpu_custom_call.1} parent=1 // pred_fallthru
      _
    %v25 = vld [vmem:[#allocation2] sm:$0xff]
    %v26 = vld [vmem:[#allocation2 + $0x8] sm:$0xff]
    %v27 = vld [vmem:[#allocation2 + $0x10] sm:$0xff]
    %v28 = vld [vmem:[#allocation2 + $0x18] sm:$0xff]
    %v29 = vld [vmem:[#allocation2 + $0x20] sm:$0xff]
    %v30 = vld [vmem:[#allocation2 + $0x28] sm:$0xff]
    %31 = vmax.xlane.f32.xlu0 %v25
    %v32 = vpop.xlane.xlu0 %31
    %33 = vmax.xlane.f32.xlu0 %v26
    %v34 = vpop.xlane.xlu0 %33
    %35 = vmax.xlane.f32.xlu0 %v27
    %v36 = vpop.xlane.xlu0 %35
    %37 = vmax.xlane.f32.xlu0 %v28
    %v38 = vpop.xlane.xlu0 %37
    %39 = vmax.xlane.f32.xlu0 %v29
    %v40 = vpop.xlane.xlu0 %39
    %41 = vmax.xlane.f32.xlu0 %v30
    %v42 = vpop.xlane.xlu0 %41
    %v43 = vsub.f32 %v25, %v32
    %v44 = vsub.f32 %v26, %v34
    %v45 = vsub.f32 %v27, %v36
    %v46 = vsub.f32 %v28, %v38
    %v47 = vsub.f32 %v29, %v40
    %v48 = vsub.f32 %v30, %v42
    %v49 = vmul.f32 %v43, 1.442695
    %v50 = vpow.pop %v49
    %v51 = vmul.f32 %v44, 1.442695
    %v52 = vpow.pop %v51
    %v53 = vmul.f32 %v45, 1.442695
    %v54 = vpow.pop %v53
    %v55 = vmul.f32 %v46, 1.442695
    %v56 = vpow.pop %v55
    %v57 = vmul.f32 %v47, 1.442695
    %v58 = vpow.pop %v57
    %v59 = vmul.f32 %v48, 1.442695
    %v60 = vpow.pop %v59
    %61 = vadd.xlane.f32.xlu0 %v50
    %v62 = vpop.xlane.xlu0 %61
    %63 = vadd.xlane.f32.xlu0 %v52
    %v64 = vpop.xlane.xlu0 %63
    %65 = vadd.xlane.f32.xlu0 %v54
    %v66 = vpop.xlane.xlu0 %65
    %67 = vadd.xlane.f32.xlu0 %v56
    %v68 = vpop.xlane.xlu0 %67
    %69 = vadd.xlane.f32.xlu0 %v58
    %v70 = vpop.xlane.xlu0 %69
    %71 = vadd.xlane.f32.xlu0 %v60
    %v72 = vpop.xlane.xlu0 %71
    %v73 = vlog2.pop %v62
    %v74 = vmul.f32 %v73, 0.6931472
    %v75 = vlog2.pop %v64
    %v76 = vmul.f32 %v75, 0.6931472
    %v77 = vlog2.pop %v66
    %v78 = vmul.f32 %v77, 0.6931472
    %v79 = vlog2.pop %v68
    %v80 = vmul.f32 %v79, 0.6931472
    %v81 = vlog2.pop %v70
    %v82 = vmul.f32 %v81, 0.6931472
    %v83 = vlog2.pop %v72
    %v84 = vmul.f32 %v83, 0.6931472
    %v85 = vsub.f32 %v43, %v74
    %v86 = vsub.f32 %v44, %v76
    %v87 = vsub.f32 %v45, %v78
    %v88 = vsub.f32 %v46, %v80
    %v89 = vsub.f32 %v47, %v82
    %v90 = vsub.f32 %v48, %v84
    %91 = vst [vmem:[#allocation5] sm:$0xff] %v85
    %92 = vst [vmem:[#allocation5 + $0x8] sm:$0xff] %v86
    %93 = vst [vmem:[#allocation5 + $0x10] sm:$0xff] %v87
    %94 = vst [vmem:[#allocation5 + $0x18] sm:$0xff] %v88
    %95 = vst [vmem:[#allocation5 + $0x20] sm:$0xff] %v89
    %96 = vst [vmem:[#allocation5 + $0x28] sm:$0xff] %v90
    // Predicated region
    $region10: #{tpu_custom_call.1} parent=1 // pred_check
      _
    $region11: #{tpu_custom_call.1} parent=1 // pred_check_branch
      %98 = sbr.rel (0) target = $region13
    $region12: #{tpu_custom_call.1} parent=1 // pred_region
      %100 = vsyncadd [#allocation4], 0
      %s101 = sshll.u32 [#allocation5], 4
      %s102 = int_to_ptr.vmem [resolvable:$true] %s101
      %s103 = sshll.u32 %s1, 4
      %s104 = int_to_ptr.hbm [resolvable:$true] %s103
      %109 = dma.vmem_to_hbm [thread:$0]  %s102, 768, %s104, [#allocation4], 128, 128, 8
    $region13: #{tpu_custom_call.1} parent=1 // pred_fallthru
      _
    // Predicated region
    $region14: #{tpu_custom_call.1} parent=1 // pred_check
      _
    $region15: #{tpu_custom_call.1} parent=1 // pred_check_branch
      %111 = sbr.rel (0) target = $region17
    $region16: #{tpu_custom_call.1} parent=1 // pred_region
      %113 = dma.done [#allocation4], 768
    $region17: #{tpu_custom_call.1} parent=1 // pred_fallthru
      _
    %114 = vsyncpa [#allocation3], 1
    %115 = vsyncpa [#allocation4], 1

</llo_original>
